<compile_context>
chip_gen: v6e
topology: v6e:2x2x1
jax: 0.10.0
libtpu: 0.0.40
codegen_flags: <defaults>
</compile_context>

<pallas_src>
import math
import functools

import jax
import jax.numpy as jnp
from jax.experimental import pallas as pl
from jax.experimental.pallas import tpu as pltpu


# ----------------------------------------------------------------------------
# DCT filter construction (plain-JAX glue; mirrors PyTorch get_dct_filter)
# ----------------------------------------------------------------------------
def build_filter_1d(pos, freq, POS):
    result = jnp.cos(math.pi * freq * (pos + 0.5) / POS) / math.sqrt(POS)
    if freq == 0:
        return result
    return result * math.sqrt(2)


def get_dct_filter(height, width, mapper_x, mapper_y, channel):
    assert len(mapper_x) == len(mapper_y)
    assert channel % len(mapper_x) == 0
    c_part = channel // len(mapper_x)

    t_x = jnp.arange(height, dtype=jnp.float32)
    t_y = jnp.arange(width, dtype=jnp.float32)

    parts = []
    for (u_x, v_y) in zip(mapper_x, mapper_y):
        fx = build_filter_1d(t_x, u_x, height)          # (H,)
        fy = build_filter_1d(t_y, v_y, width)           # (W,)
        filt = fx[:, None] * fy[None, :]                # (H, W)
        parts.append(jnp.broadcast_to(filt[None], (c_part, height, width)))
    return jnp.concatenate(parts, axis=0)               # (C, H, W)


# ----------------------------------------------------------------------------
# Pallas kernel: elementwise multiply, f32 accumulate, finalize reduce+store
# ----------------------------------------------------------------------------
def _dct_reduce_kernel(x_ref, w_ref, o_ref, acc_ref, *, hw, ts, need_mask):
    # x_ref: (TN, TS, TC)  w_ref: (TS, TC)  o_ref: (TN, TC)
    # acc_ref: (TN, TS, TC) f32 scratch, resident across the reduction axis.
    k = pl.program_id(2)

    @pl.when(k == 0)
    def _():
        acc_ref[...] = jnp.zeros_like(acc_ref)

    prod = (x_ref[...].astype(jnp.float32)
            * w_ref[...][None, :, :].astype(jnp.float32))      # (TN, TS, TC)

    if need_mask:
        # Partial last spatial tile: zero out-of-range positions (select, so
        # garbage in the padded region can never poison the accumulator).
        s_idx = k * ts + jax.lax.broadcasted_iota(jnp.int32, prod.shape, 1)
        prod = jnp.where(s_idx < hw, prod, 0.0)

    acc_ref[...] += prod                                        # pure VPU

    @pl.when(k == pl.num_programs(2) - 1)
    def _():
        # Single cross-sublane reduce + lane-dense store per (n, c) tile.
        o_ref[...] = jnp.sum(acc_ref[...], axis=1).astype(o_ref.dtype)


# ----------------------------------------------------------------------------
# Block-size heuristic (generation-robust: ~2 MB x blocks << 64 MiB VMEM)
# ----------------------------------------------------------------------------
def _pick_tiles(N, C, HW, itemsize, target_x_block_bytes=2 << 20):
    # Channel tile (lane axis): multiple of 128, or full C.
    if C % 256 == 0:
        TC = 256
    elif C % 128 == 0:
        TC = 128
    else:
        TC = C
    # Spatial (reduction) tile (sublane axis): multiple of 8, or full HW.
    if HW % 8 == 0:
        TS = min(HW, 512)
    else:
        TS = HW
    # Batch tile: multiple of 8 (output sublane constraint) dividing N, sized
    # so the x block hits the target bytes; else full N.
    if N % 8 == 0:
        per_row = TS * TC * itemsize
        TN = max(8, (target_x_block_bytes // per_row) // 8 * 8)
        TN = min(TN, N)
        while N % TN != 0:
            TN -= 8
        TN = max(TN, 8)
    else:
        TN = N
    return TN, TC, TS


def multi_spectral_dct_forward(x, weight):
    """x: (N, C, H, W), weight: (C, H, W) -> (N, C)."""
    N, C, H, W = x.shape
    assert weight.shape == (C, H, W)
    HW = H * W

    # Lane-dense layout plumbing: channels on lanes, spatial on sublanes.
    x_t = jnp.transpose(x.reshape(N, C, HW), (0, 2, 1))      # (N, HW, C)
    w_t = jnp.transpose(weight.reshape(C, HW), (1, 0))       # (HW, C)

    TN, TC, TS = _pick_tiles(N, C, HW, x.dtype.itemsize)
    gn = pl.cdiv(N, TN)
    gc = pl.cdiv(C, TC)
    gk = pl.cdiv(HW, TS)
    need_mask = (HW % TS) != 0

    kernel = functools.partial(_dct_reduce_kernel, hw=HW, ts=TS,
                               need_mask=need_mask)

    # Rough VMEM budget: double-buffered x/w blocks + out + f32 accumulator.
    vmem_bytes = (2 * TN * TS * TC * x.dtype.itemsize
                  + 2 * TS * TC * weight.dtype.itemsize
                  + 2 * TN * TC * x.dtype.itemsize
                  + TN * TS * TC * 4)
    vmem_limit = int(min(64 * 1024 * 1024,
                         max(2 * vmem_bytes, 16 * 1024 * 1024)))

    out = pl.pallas_call(
        kernel,
        out_shape=jax.ShapeDtypeStruct((N, C), x.dtype),
        grid_spec=pltpu.PrefetchScalarGridSpec(
            num_scalar_prefetch=0,
            grid=(gn, gc, gk),
            in_specs=[
                pl.BlockSpec((TN, TS, TC), lambda n, c, k: (n, k, c)),
                pl.BlockSpec((TS, TC), lambda n, c, k: (k, c)),
            ],
            out_specs=pl.BlockSpec((TN, TC), lambda n, c, k: (n, c)),
            scratch_shapes=[pltpu.VMEM((TN, TS, TC), jnp.float32)],
        ),
        compiler_params=pltpu.CompilerParams(
            dimension_semantics=("parallel", "parallel", "arbitrary"),
            vmem_limit_bytes=vmem_limit,
        ),
    )(x_t, w_t)
    return out


# ----------------------------------------------------------------------------
# Reference (pure JAX) for verification
# ----------------------------------------------------------------------------
def reference_forward(x, weight):
    return jnp.sum(x * weight[None], axis=(2, 3))


if __name__ == "__main__":
    # Small, deterministic example consistent with the module:
    # batch=2, channel=4, height=width=16, num_freq=2 (channel % num_freq == 0)
    N, C, H, W = 2, 4, 16, 16
    mapper_x = [0, 1]
    mapper_y = [0, 1]

    weight = get_dct_filter(H, W, mapper_x, mapper_y, C)   # (C, H, W)

    key = jax.random.PRNGKey(0)
    x = jax.random.normal(key, (N, C, H, W), dtype=jnp.float32)

    out = multi_spectral_dct_forward(x, weight)
    out = jax.block_until_ready(out)

    ref = reference_forward(x, weight)
    assert out.shape == (N, C), out.shape
    assert jnp.allclose(out, ref, atol=1e-4, rtol=1e-4), (out, ref)

    print("KERNEL_OK")
</pallas_src>

<mosaic_0001>
module attributes {stable_mosaic.version = 11 : i64} {
  func.func @_dct_reduce_kernel(%arg0: i32, %arg1: i32, %arg2: i32, %arg3: memref<2x256x4xf32, #tpu.memory_space<vmem>>, %arg4: memref<256x4xf32, #tpu.memory_space<vmem>>, %arg5: memref<2x4xf32, #tpu.memory_space<vmem>>, %arg6: memref<2x256x4xf32, #tpu.memory_space<vmem>>) attributes {dimension_semantics = [#tpu.dimension_semantics<parallel>, #tpu.dimension_semantics<parallel>, #tpu.dimension_semantics<arbitrary>], iteration_bounds = array<i64: 1, 1, 1>, scalar_prefetch = 0 : i64, scratch_operands = 1 : i64, tpu.core_type = #tpu.core_type<tc>, window_params = [{transform_indices = @transform_0, window_bounds = array<i64: 2, 256, 4>}, {transform_indices = @transform_1, window_bounds = array<i64: 256, 4>}, {transform_indices = @transform_2, window_bounds = array<i64: 2, 4>}]} {
    %c0_i32 = arith.constant 0 : i32
    %0 = arith.cmpi eq, %arg2, %c0_i32 : i32
    %1 = arith.extui %0 : i1 to i32
    %c0_i32_0 = arith.constant 0 : i32
    %2 = arith.cmpi ne, %1, %c0_i32_0 : i32
    scf.if %2 {
      %cst = arith.constant 0.000000e+00 : f32
      %14 = vector.broadcast %cst : f32 to vector<2x256x4xf32>
      %c0_13 = arith.constant 0 : index
      %c0_14 = arith.constant 0 : index
      %c0_15 = arith.constant 0 : index
      %15 = vector.load %arg6[%c0_13, %c0_14, %c0_15] : memref<2x256x4xf32, #tpu.memory_space<vmem>>, vector<2x256x4xf32>
      tpu.vector_store %arg6[%c0_13, %c0_14, %c0_15], %14 {strides = array<i32>} : memref<2x256x4xf32, #tpu.memory_space<vmem>>, vector<2x256x4xf32>,
    } else {
    }
    %c0 = arith.constant 0 : index
    %c0_1 = arith.constant 0 : index
    %c0_2 = arith.constant 0 : index
    %3 = vector.load %arg3[%c0, %c0_1, %c0_2] : memref<2x256x4xf32, #tpu.memory_space<vmem>>, vector<2x256x4xf32>
    %c0_3 = arith.constant 0 : index
    %c0_4 = arith.constant 0 : index
    %4 = vector.load %arg4[%c0_3, %c0_4] : memref<256x4xf32, #tpu.memory_space<vmem>>, vector<256x4xf32>
    %5 = vector.shape_cast %4 : vector<256x4xf32> to vector<1x256x4xf32>
    %6 = vector.broadcast %5 : vector<1x256x4xf32> to vector<2x256x4xf32>
    %7 = arith.mulf %3, %6 : vector<2x256x4xf32>
    %c0_5 = arith.constant 0 : index
    %c0_6 = arith.constant 0 : index
    %c0_7 = arith.constant 0 : index
    %8 = vector.load %arg6[%c0_5, %c0_6, %c0_7] : memref<2x256x4xf32, #tpu.memory_space<vmem>>, vector<2x256x4xf32>
    %9 = arith.addf %8, %7 : vector<2x256x4xf32>
    %c0_8 = arith.constant 0 : index
    %c0_9 = arith.constant 0 : index
    %c0_10 = arith.constant 0 : index
    %10 = vector.load %arg6[%c0_8, %c0_9, %c0_10] : memref<2x256x4xf32, #tpu.memory_space<vmem>>, vector<2x256x4xf32>
    tpu.vector_store %arg6[%c0_8, %c0_9, %c0_10], %9 {strides = array<i32>} : memref<2x256x4xf32, #tpu.memory_space<vmem>>, vector<2x256x4xf32>,
    %c0_i32_11 = arith.constant 0 : i32
    %11 = arith.cmpi eq, %arg2, %c0_i32_11 : i32
    %12 = arith.extui %11 : i1 to i32
    %c0_i32_12 = arith.constant 0 : i32
    %13 = arith.cmpi ne, %12, %c0_i32_12 : i32
    scf.if %13 {
      %c0_13 = arith.constant 0 : index
      %c0_14 = arith.constant 0 : index
      %c0_15 = arith.constant 0 : index
      %14 = vector.load %arg6[%c0_13, %c0_14, %c0_15] : memref<2x256x4xf32, #tpu.memory_space<vmem>>, vector<2x256x4xf32>
      %cst = arith.constant dense<0.000000e+00> : vector<2x4xf32>
      %15 = vector.multi_reduction <add>, %14, %cst [1] : vector<2x256x4xf32> to vector<2x4xf32>
      %c0_16 = arith.constant 0 : index
      %c0_17 = arith.constant 0 : index
      %16 = vector.load %arg5[%c0_16, %c0_17] : memref<2x4xf32, #tpu.memory_space<vmem>>, vector<2x4xf32>
      tpu.vector_store %arg5[%c0_16, %c0_17], %15 {strides = array<i32>} : memref<2x4xf32, #tpu.memory_space<vmem>>, vector<2x4xf32>,
    } else {
    }
    return
  }
  func.func @transform_0(%arg0: i32, %arg1: i32, %arg2: i32) -> (i32, i32, i32) {
    %c0_i32 = arith.constant 0 : i32
    return %arg0, %arg2, %arg1 : i32, i32, i32
  }
  func.func @transform_1(%arg0: i32, %arg1: i32, %arg2: i32) -> (i32, i32) {
    %c0_i32 = arith.constant 0 : i32
    return %arg2, %arg1 : i32, i32
  }
  func.func @transform_2(%arg0: i32, %arg1: i32, %arg2: i32) -> (i32, i32) {
    %c0_i32 = arith.constant 0 : i32
    return %arg0, %arg1 : i32, i32
  }
}

</mosaic_0001>

<llo_original>
// kernel: tpu_custom_call.1
$region0: #{tpu_custom_call.1}
  #allocation0 [shape = 'u32[]', space=smem, size = 0x4, offset = 0x4, fixed_abs, tag = 'smem constant byte address 0x4 - core index']
  #allocation1 [shape = 'u32[144,128]{1,0:T(1,128)}', space=vmem, size = 0x12000, scoped, tag = 'internal scratch']
  #allocation2 [shape = 'f32[2,256,4]{2,1,0:T(8,128)}', space=vmem, size = 0x40000, scoped, tag = 'scratch operand']
  %s0 = inlined_call_operand.vmem [shape: f32[2,256,4], index: 0, kind: input, shape index: {}]
  %s1 = inlined_call_operand.vmem [shape: f32[256,4], index: 1, kind: input, shape index: {}]
  %s2 = inlined_call_operand.hbm [shape: f32[2,4], index: 2, kind: output, shape index: {}]
  %s3 = sld [smem:[#allocation0]]
  $region26: #{tpu_custom_call.1} parent=0
    _
  %s5 = ssub.s32 1, %s3
  %s6 = scalar_select 0, %s5, %s3
  $region1: #{tpu_custom_call.1} parent=0
    #allocation3 [shape = 'u8[1024]{0}', space=vmem, size = 0x400, scoped, tag = 'output window, operand 0, single buffered']
    #allocation4 [shape = 's32[1]{0}', space=sflag, size = 0x4, scoped, tag = 'scoped memory for tpu_custom_call.1']
    %7 = vsyncpa [#allocation4], 0
    // Predicated region
    $region2: #{tpu_custom_call.1} parent=1 // pred_check
      _
    $region3: #{tpu_custom_call.1} parent=1 // pred_check_branch
      %9 = sbr.rel (0) target = $region5
    $region4: #{tpu_custom_call.1} parent=1 // pred_region
      _
    $region5: #{tpu_custom_call.1} parent=1 // pred_fallthru
      _
    // Predicated region
    $region6: #{tpu_custom_call.1} parent=1 // pred_check
      _
    $region7: #{tpu_custom_call.1} parent=1 // pred_check_branch
      %11 = sbr.rel (0) target = $region9
    $region8: #{tpu_custom_call.1} parent=1 // pred_region
      _
    $region9: #{tpu_custom_call.1} parent=1 // pred_fallthru
      _
    %p12 = scmp.eq.s32.totalorder 0, 0
    // Predicated region
    $region10: #{tpu_custom_call.1} parent=1 // pred_check
      %p13 = pneg %p12
    $region11: #{tpu_custom_call.1} parent=1 // pred_check_branch
      %15 = sbr.rel (%p13) target = $region13
    $region12: #{tpu_custom_call.1} parent=1 // pred_region
      %vm16 = vcmask 31744
      %17 = vst.msk [vmem:[#allocation2] sm:$0xff] %vm16, 0.0
      %18 = vst.msk [vmem:[#allocation2 + $0x8] sm:$0xff] %vm16, 0.0
      %19 = vst.msk [vmem:[#allocation2 + $0x10] sm:$0xff] %vm16, 0.0
      %20 = vst.msk [vmem:[#allocation2 + $0x18] sm:$0xff] %vm16, 0.0
      %21 = vst.msk [vmem:[#allocation2 + $0x20] sm:$0xff] %vm16, 0.0
      %22 = vst.msk [vmem:[#allocation2 + $0x28] sm:$0xff] %vm16, 0.0
      %23 = vst.msk [vmem:[#allocation2 + $0x30] sm:$0xff] %vm16, 0.0
      %24 = vst.msk [vmem:[#allocation2 + $0x38] sm:$0xff] %vm16, 0.0
      %25 = vst.msk [vmem:[#allocation2 + $0x40] sm:$0xff] %vm16, 0.0
      %26 = vst.msk [vmem:[#allocation2 + $0x48] sm:$0xff] %vm16, 0.0
      %27 = vst.msk [vmem:[#allocation2 + $0x50] sm:$0xff] %vm16, 0.0
      %28 = vst.msk [vmem:[#allocation2 + $0x58] sm:$0xff] %vm16, 0.0
      %29 = vst.msk [vmem:[#allocation2 + $0x60] sm:$0xff] %vm16, 0.0
      %30 = vst.msk [vmem:[#allocation2 + $0x68] sm:$0xff] %vm16, 0.0
      %31 = vst.msk [vmem:[#allocation2 + $0x70] sm:$0xff] %vm16, 0.0
      %32 = vst.msk [vmem:[#allocation2 + $0x78] sm:$0xff] %vm16, 0.0
      %33 = vst.msk [vmem:[#allocation2 + $0x80] sm:$0xff] %vm16, 0.0
      %34 = vst.msk [vmem:[#allocation2 + $0x88] sm:$0xff] %vm16, 0.0
      %35 = vst.msk [vmem:[#allocation2 + $0x90] sm:$0xff] %vm16, 0.0
      %36 = vst.msk [vmem:[#allocation2 + $0x98] sm:$0xff] %vm16, 0.0
      %37 = vst.msk [vmem:[#allocation2 + $0xa0] sm:$0xff] %vm16, 0.0
      %38 = vst.msk [vmem:[#allocation2 + $0xa8] sm:$0xff] %vm16, 0.0
      %39 = vst.msk [vmem:[#allocation2 + $0xb0] sm:$0xff] %vm16, 0.0
      %40 = vst.msk [vmem:[#allocation2 + $0xb8] sm:$0xff] %vm16, 0.0
      %41 = vst.msk [vmem:[#allocation2 + $0xc0] sm:$0xff] %vm16, 0.0
      %42 = vst.msk [vmem:[#allocation2 + $0xc8] sm:$0xff] %vm16, 0.0
      %43 = vst.msk [vmem:[#allocation2 + $0xd0] sm:$0xff] %vm16, 0.0
      %44 = vst.msk [vmem:[#allocation2 + $0xd8] sm:$0xff] %vm16, 0.0
      %45 = vst.msk [vmem:[#allocation2 + $0xe0] sm:$0xff] %vm16, 0.0
      %46 = vst.msk [vmem:[#allocation2 + $0xe8] sm:$0xff] %vm16, 0.0
      %47 = vst.msk [vmem:[#allocation2 + $0xf0] sm:$0xff] %vm16, 0.0
      %48 = vst.msk [vmem:[#allocation2 + $0xf8] sm:$0xff] %vm16, 0.0
      %49 = vst.msk [vmem:[#allocation2 + $0x100] sm:$0xff] %vm16, 0.0
      %50 = vst.msk [vmem:[#allocation2 + $0x108] sm:$0xff] %vm16, 0.0
      %51 = vst.msk [vmem:[#allocation2 + $0x110] sm:$0xff] %vm16, 0.0
      %52 = vst.msk [vmem:[#allocation2 + $0x118] sm:$0xff] %vm16, 0.0
      %53 = vst.msk [vmem:[#allocation2 + $0x120] sm:$0xff] %vm16, 0.0
      %54 = vst.msk [vmem:[#allocation2 + $0x128] sm:$0xff] %vm16, 0.0
      %55 = vst.msk [vmem:[#allocation2 + $0x130] sm:$0xff] %vm16, 0.0
      %56 = vst.msk [vmem:[#allocation2 + $0x138] sm:$0xff] %vm16, 0.0
      %57 = vst.msk [vmem:[#allocation2 + $0x140] sm:$0xff] %vm16, 0.0
      %58 = vst.msk [vmem:[#allocation2 + $0x148] sm:$0xff] %vm16, 0.0
      %59 = vst.msk [vmem:[#allocation2 + $0x150] sm:$0xff] %vm16, 0.0
      %60 = vst.msk [vmem:[#allocation2 + $0x158] sm:$0xff] %vm16, 0.0
      %61 = vst.msk [vmem:[#allocation2 + $0x160] sm:$0xff] %vm16, 0.0
      %62 = vst.msk [vmem:[#allocation2 + $0x168] sm:$0xff] %vm16, 0.0
      %63 = vst.msk [vmem:[#allocation2 + $0x170] sm:$0xff] %vm16, 0.0
      %64 = vst.msk [vmem:[#allocation2 + $0x178] sm:$0xff] %vm16, 0.0
      %65 = vst.msk [vmem:[#allocation2 + $0x180] sm:$0xff] %vm16, 0.0
      %66 = vst.msk [vmem:[#allocation2 + $0x188] sm:$0xff] %vm16, 0.0
      %67 = vst.msk [vmem:[#allocation2 + $0x190] sm:$0xff] %vm16, 0.0
      %68 = vst.msk [vmem:[#allocation2 + $0x198] sm:$0xff] %vm16, 0.0
      %69 = vst.msk [vmem:[#allocation2 + $0x1a0] sm:$0xff] %vm16, 0.0
      %70 = vst.msk [vmem:[#allocation2 + $0x1a8] sm:$0xff] %vm16, 0.0
      %71 = vst.msk [vmem:[#allocation2 + $0x1b0] sm:$0xff] %vm16, 0.0
      %72 = vst.msk [vmem:[#allocation2 + $0x1b8] sm:$0xff] %vm16, 0.0
      %73 = vst.msk [vmem:[#allocation2 + $0x1c0] sm:$0xff] %vm16, 0.0
      %74 = vst.msk [vmem:[#allocation2 + $0x1c8] sm:$0xff] %vm16, 0.0
      %75 = vst.msk [vmem:[#allocation2 + $0x1d0] sm:$0xff] %vm16, 0.0
      %76 = vst.msk [vmem:[#allocation2 + $0x1d8] sm:$0xff] %vm16, 0.0
      %77 = vst.msk [vmem:[#allocation2 + $0x1e0] sm:$0xff] %vm16, 0.0
      %78 = vst.msk [vmem:[#allocation2 + $0x1e8] sm:$0xff] %vm16, 0.0
      %79 = vst.msk [vmem:[#allocation2 + $0x1f0] sm:$0xff] %vm16, 0.0
      %80 = vst.msk [vmem:[#allocation2 + $0x1f8] sm:$0xff] %vm16, 0.0
    $region13: #{tpu_custom_call.1} parent=1 // pred_fallthru
      _
    %v81 = vld [vmem:[%s0] sm:$0xff]
    %v82 = vld [vmem:[%s0 + $0x8] sm:$0xff]
    %v83 = vld [vmem:[%s0 + $0x10] sm:$0xff]
    %v84 = vld [vmem:[%s0 + $0x18] sm:$0xff]
    %v85 = vld [vmem:[%s0 + $0x20] sm:$0xff]
    %v86 = vld [vmem:[%s0 + $0x28] sm:$0xff]
    %v87 = vld [vmem:[%s0 + $0x30] sm:$0xff]
    %v88 = vld [vmem:[%s0 + $0x38] sm:$0xff]
    %v89 = vld [vmem:[%s0 + $0x40] sm:$0xff]
    %v90 = vld [vmem:[%s0 + $0x48] sm:$0xff]
    %v91 = vld [vmem:[%s0 + $0x50] sm:$0xff]
    %v92 = vld [vmem:[%s0 + $0x58] sm:$0xff]
    %v93 = vld [vmem:[%s0 + $0x60] sm:$0xff]
    %v94 = vld [vmem:[%s0 + $0x68] sm:$0xff]
    %v95 = vld [vmem:[%s0 + $0x70] sm:$0xff]
    %v96 = vld [vmem:[%s0 + $0x78] sm:$0xff]
    %v97 = vld [vmem:[%s0 + $0x80] sm:$0xff]
    %v98 = vld [vmem:[%s0 + $0x88] sm:$0xff]
    %v99 = vld [vmem:[%s0 + $0x90] sm:$0xff]
    %v100 = vld [vmem:[%s0 + $0x98] sm:$0xff]
    %v101 = vld [vmem:[%s0 + $0xa0] sm:$0xff]
    %v102 = vld [vmem:[%s0 + $0xa8] sm:$0xff]
    %v103 = vld [vmem:[%s0 + $0xb0] sm:$0xff]
    %v104 = vld [vmem:[%s0 + $0xb8] sm:$0xff]
    %v105 = vld [vmem:[%s0 + $0xc0] sm:$0xff]
    %v106 = vld [vmem:[%s0 + $0xc8] sm:$0xff]
    %v107 = vld [vmem:[%s0 + $0xd0] sm:$0xff]
    %v108 = vld [vmem:[%s0 + $0xd8] sm:$0xff]
    %v109 = vld [vmem:[%s0 + $0xe0] sm:$0xff]
    %v110 = vld [vmem:[%s0 + $0xe8] sm:$0xff]
    %v111 = vld [vmem:[%s0 + $0xf0] sm:$0xff]
    %v112 = vld [vmem:[%s0 + $0xf8] sm:$0xff]
    %v113 = vld [vmem:[%s0 + $0x100] sm:$0xff]
    %v114 = vld [vmem:[%s0 + $0x108] sm:$0xff]
    %v115 = vld [vmem:[%s0 + $0x110] sm:$0xff]
    %v116 = vld [vmem:[%s0 + $0x118] sm:$0xff]
    %v117 = vld [vmem:[%s0 + $0x120] sm:$0xff]
    %v118 = vld [vmem:[%s0 + $0x128] sm:$0xff]
    %v119 = vld [vmem:[%s0 + $0x130] sm:$0xff]
    %v120 = vld [vmem:[%s0 + $0x138] sm:$0xff]
    %v121 = vld [vmem:[%s0 + $0x140] sm:$0xff]
    %v122 = vld [vmem:[%s0 + $0x148] sm:$0xff]
    %v123 = vld [vmem:[%s0 + $0x150] sm:$0xff]
    %v124 = vld [vmem:[%s0 + $0x158] sm:$0xff]
    %v125 = vld [vmem:[%s0 + $0x160] sm:$0xff]
    %v126 = vld [vmem:[%s0 + $0x168] sm:$0xff]
    %v127 = vld [vmem:[%s0 + $0x170] sm:$0xff]
    %v128 = vld [vmem:[%s0 + $0x178] sm:$0xff]
    %v129 = vld [vmem:[%s0 + $0x180] sm:$0xff]
    %v130 = vld [vmem:[%s0 + $0x188] sm:$0xff]
    %v131 = vld [vmem:[%s0 + $0x190] sm:$0xff]
    %v132 = vld [vmem:[%s0 + $0x198] sm:$0xff]
    %v133 = vld [vmem:[%s0 + $0x1a0] sm:$0xff]
    %v134 = vld [vmem:[%s0 + $0x1a8] sm:$0xff]
    %v135 = vld [vmem:[%s0 + $0x1b0] sm:$0xff]
    %v136 = vld [vmem:[%s0 + $0x1b8] sm:$0xff]
    %v137 = vld [vmem:[%s0 + $0x1c0] sm:$0xff]
    %v138 = vld [vmem:[%s0 + $0x1c8] sm:$0xff]
    %v139 = vld [vmem:[%s0 + $0x1d0] sm:$0xff]
    %v140 = vld [vmem:[%s0 + $0x1d8] sm:$0xff]
    %v141 = vld [vmem:[%s0 + $0x1e0] sm:$0xff]
    %v142 = vld [vmem:[%s0 + $0x1e8] sm:$0xff]
    %v143 = vld [vmem:[%s0 + $0x1f0] sm:$0xff]
    %v144 = vld [vmem:[%s0 + $0x1f8] sm:$0xff]
    %v145 = vld [vmem:[%s1] sm:$0xff]
    %v146 = vld [vmem:[%s1 + $0x8] sm:$0xff]
    %v147 = vld [vmem:[%s1 + $0x10] sm:$0xff]
    %v148 = vld [vmem:[%s1 + $0x18] sm:$0xff]
    %v149 = vld [vmem:[%s1 + $0x20] sm:$0xff]
    %v150 = vld [vmem:[%s1 + $0x28] sm:$0xff]
    %v151 = vld [vmem:[%s1 + $0x30] sm:$0xff]
    %v152 = vld [vmem:[%s1 + $0x38] sm:$0xff]
    %v153 = vld [vmem:[%s1 + $0x40] sm:$0xff]
    %v154 = vld [vmem:[%s1 + $0x48] sm:$0xff]
    %v155 = vld [vmem:[%s1 + $0x50] sm:$0xff]
    %v156 = vld [vmem:[%s1 + $0x58] sm:$0xff]
    %v157 = vld [vmem:[%s1 + $0x60] sm:$0xff]
    %v158 = vld [vmem:[%s1 + $0x68] sm:$0xff]
    %v159 = vld [vmem:[%s1 + $0x70] sm:$0xff]
    %v160 = vld [vmem:[%s1 + $0x78] sm:$0xff]
    %v161 = vld [vmem:[%s1 + $0x80] sm:$0xff]
    %v162 = vld [vmem:[%s1 + $0x88] sm:$0xff]
    %v163 = vld [vmem:[%s1 + $0x90] sm:$0xff]
    %v164 = vld [vmem:[%s1 + $0x98] sm:$0xff]
    %v165 = vld [vmem:[%s1 + $0xa0] sm:$0xff]
    %v166 = vld [vmem:[%s1 + $0xa8] sm:$0xff]
    %v167 = vld [vmem:[%s1 + $0xb0] sm:$0xff]
    %v168 = vld [vmem:[%s1 + $0xb8] sm:$0xff]
    %v169 = vld [vmem:[%s1 + $0xc0] sm:$0xff]
    %v170 = vld [vmem:[%s1 + $0xc8] sm:$0xff]
    %v171 = vld [vmem:[%s1 + $0xd0] sm:$0xff]
    %v172 = vld [vmem:[%s1 + $0xd8] sm:$0xff]
    %v173 = vld [vmem:[%s1 + $0xe0] sm:$0xff]
    %v174 = vld [vmem:[%s1 + $0xe8] sm:$0xff]
    %v175 = vld [vmem:[%s1 + $0xf0] sm:$0xff]
    %v176 = vld [vmem:[%s1 + $0xf8] sm:$0xff]
    %v177 = vmul.f32 %v81, %v145
    %v178 = vmul.f32 %v82, %v146
    %v179 = vmul.f32 %v83, %v147
    %v180 = vmul.f32 %v84, %v148
    %v181 = vmul.f32 %v85, %v149
    %v182 = vmul.f32 %v86, %v150
    %v183 = vmul.f32 %v87, %v151
    %v184 = vmul.f32 %v88, %v152
    %v185 = vmul.f32 %v89, %v153
    %v186 = vmul.f32 %v90, %v154
    %v187 = vmul.f32 %v91, %v155
    %v188 = vmul.f32 %v92, %v156
    %v189 = vmul.f32 %v93, %v157
    %v190 = vmul.f32 %v94, %v158
    %v191 = vmul.f32 %v95, %v159
    %v192 = vmul.f32 %v96, %v160
    %v193 = vmul.f32 %v97, %v161
    %v194 = vmul.f32 %v98, %v162
    %v195 = vmul.f32 %v99, %v163
    %v196 = vmul.f32 %v100, %v164
    %v197 = vmul.f32 %v101, %v165
    %v198 = vmul.f32 %v102, %v166
    %v199 = vmul.f32 %v103, %v167
    %v200 = vmul.f32 %v104, %v168
    %v201 = vmul.f32 %v105, %v169
    %v202 = vmul.f32 %v106, %v170
    %v203 = vmul.f32 %v107, %v171
    %v204 = vmul.f32 %v108, %v172
    %v205 = vmul.f32 %v109, %v173
    %v206 = vmul.f32 %v110, %v174
    %v207 = vmul.f32 %v111, %v175
    %v208 = vmul.f32 %v112, %v176
    %v209 = vmul.f32 %v113, %v145
    %v210 = vmul.f32 %v114, %v146
    %v211 = vmul.f32 %v115, %v147
    %v212 = vmul.f32 %v116, %v148
    %v213 = vmul.f32 %v117, %v149
    %v214 = vmul.f32 %v118, %v150
    %v215 = vmul.f32 %v119, %v151
    %v216 = vmul.f32 %v120, %v152
    %v217 = vmul.f32 %v121, %v153
    %v218 = vmul.f32 %v122, %v154
    %v219 = vmul.f32 %v123, %v155
    %v220 = vmul.f32 %v124, %v156
    %v221 = vmul.f32 %v125, %v157
    %v222 = vmul.f32 %v126, %v158
    %v223 = vmul.f32 %v127, %v159
    %v224 = vmul.f32 %v128, %v160
    %v225 = vmul.f32 %v129, %v161
    %v226 = vmul.f32 %v130, %v162
    %v227 = vmul.f32 %v131, %v163
    %v228 = vmul.f32 %v132, %v164
    %v229 = vmul.f32 %v133, %v165
    %v230 = vmul.f32 %v134, %v166
    %v231 = vmul.f32 %v135, %v167
    %v232 = vmul.f32 %v136, %v168
    %v233 = vmul.f32 %v137, %v169
    %v234 = vmul.f32 %v138, %v170
    %v235 = vmul.f32 %v139, %v171
    %v236 = vmul.f32 %v140, %v172
    %v237 = vmul.f32 %v141, %v173
    %v238 = vmul.f32 %v142, %v174
    %v239 = vmul.f32 %v143, %v175
    %v240 = vmul.f32 %v144, %v176
    %v241 = vld [vmem:[#allocation2] sm:$0xff]
    %v242 = vld [vmem:[#allocation2 + $0x8] sm:$0xff]
    %v243 = vld [vmem:[#allocation2 + $0x10] sm:$0xff]
    %v244 = vld [vmem:[#allocation2 + $0x18] sm:$0xff]
    %v245 = vld [vmem:[#allocation2 + $0x20] sm:$0xff]
    %v246 = vld [vmem:[#allocation2 + $0x28] sm:$0xff]
    %v247 = vld [vmem:[#allocation2 + $0x30] sm:$0xff]
    %v248 = vld [vmem:[#allocation2 + $0x38] sm:$0xff]
    %v249 = vld [vmem:[#allocation2 + $0x40] sm:$0xff]
    %v250 = vld [vmem:[#allocation2 + $0x48] sm:$0xff]
    %v251 = vld [vmem:[#allocation2 + $0x50] sm:$0xff]
    %v252 = vld [vmem:[#allocation2 + $0x58] sm:$0xff]
    %v253 = vld [vmem:[#allocation2 + $0x60] sm:$0xff]
    %v254 = vld [vmem:[#allocation2 + $0x68] sm:$0xff]
    %v255 = vld [vmem:[#allocation2 + $0x70] sm:$0xff]
    %v256 = vld [vmem:[#allocation2 + $0x78] sm:$0xff]
    %v257 = vld [vmem:[#allocation2 + $0x80] sm:$0xff]
    %v258 = vld [vmem:[#allocation2 + $0x88] sm:$0xff]
    %v259 = vld [vmem:[#allocation2 + $0x90] sm:$0xff]
    %v260 = vld [vmem:[#allocation2 + $0x98] sm:$0xff]
    %v261 = vld [vmem:[#allocation2 + $0xa0] sm:$0xff]
    %v262 = vld [vmem:[#allocation2 + $0xa8] sm:$0xff]
    %v263 = vld [vmem:[#allocation2 + $0xb0] sm:$0xff]
    %v264 = vld [vmem:[#allocation2 + $0xb8] sm:$0xff]
    %v265 = vld [vmem:[#allocation2 + $0xc0] sm:$0xff]
    %v266 = vld [vmem:[#allocation2 + $0xc8] sm:$0xff]
    %v267 = vld [vmem:[#allocation2 + $0xd0] sm:$0xff]
    %v268 = vld [vmem:[#allocation2 + $0xd8] sm:$0xff]
    %v269 = vld [vmem:[#allocation2 + $0xe0] sm:$0xff]
    %v270 = vld [vmem:[#allocation2 + $0xe8] sm:$0xff]
    %v271 = vld [vmem:[#allocation2 + $0xf0] sm:$0xff]
    %v272 = vld [vmem:[#allocation2 + $0xf8] sm:$0xff]
    %v273 = vld [vmem:[#allocation2 + $0x100] sm:$0xff]
    %v274 = vld [vmem:[#allocation2 + $0x108] sm:$0xff]
    %v275 = vld [vmem:[#allocation2 + $0x110] sm:$0xff]
    %v276 = vld [vmem:[#allocation2 + $0x118] sm:$0xff]
    %v277 = vld [vmem:[#allocation2 + $0x120] sm:$0xff]
    %v278 = vld [vmem:[#allocation2 + $0x128] sm:$0xff]
    %v279 = vld [vmem:[#allocation2 + $0x130] sm:$0xff]
    %v280 = vld [vmem:[#allocation2 + $0x138] sm:$0xff]
    %v281 = vld [vmem:[#allocation2 + $0x140] sm:$0xff]
    %v282 = vld [vmem:[#allocation2 + $0x148] sm:$0xff]
    %v283 = vld [vmem:[#allocation2 + $0x150] sm:$0xff]
    %v284 = vld [vmem:[#allocation2 + $0x158] sm:$0xff]
    %v285 = vld [vmem:[#allocation2 + $0x160] sm:$0xff]
    %v286 = vld [vmem:[#allocation2 + $0x168] sm:$0xff]
    %v287 = vld [vmem:[#allocation2 + $0x170] sm:$0xff]
    %v288 = vld [vmem:[#allocation2 + $0x178] sm:$0xff]
    %v289 = vld [vmem:[#allocation2 + $0x180] sm:$0xff]
    %v290 = vld [vmem:[#allocation2 + $0x188] sm:$0xff]
    %v291 = vld [vmem:[#allocation2 + $0x190] sm:$0xff]
    %v292 = vld [vmem:[#allocation2 + $0x198] sm:$0xff]
    %v293 = vld [vmem:[#allocation2 + $0x1a0] sm:$0xff]
    %v294 = vld [vmem:[#allocation2 + $0x1a8] sm:$0xff]
    %v295 = vld [vmem:[#allocation2 + $0x1b0] sm:$0xff]
    %v296 = vld [vmem:[#allocation2 + $0x1b8] sm:$0xff]
    %v297 = vld [vmem:[#allocation2 + $0x1c0] sm:$0xff]
    %v298 = vld [vmem:[#allocation2 + $0x1c8] sm:$0xff]
    %v299 = vld [vmem:[#allocation2 + $0x1d0] sm:$0xff]
    %v300 = vld [vmem:[#allocation2 + $0x1d8] sm:$0xff]
    %v301 = vld [vmem:[#allocation2 + $0x1e0] sm:$0xff]
    %v302 = vld [vmem:[#allocation2 + $0x1e8] sm:$0xff]
    %v303 = vld [vmem:[#allocation2 + $0x1f0] sm:$0xff]
    %v304 = vld [vmem:[#allocation2 + $0x1f8] sm:$0xff]
    %v305 = vadd.f32 %v241, %v177
    %v306 = vadd.f32 %v242, %v178
    %v307 = vadd.f32 %v243, %v179
    %v308 = vadd.f32 %v244, %v180
    %v309 = vadd.f32 %v245, %v181
    %v310 = vadd.f32 %v246, %v182
    %v311 = vadd.f32 %v247, %v183
    %v312 = vadd.f32 %v248, %v184
    %v313 = vadd.f32 %v249, %v185
    %v314 = vadd.f32 %v250, %v186
    %v315 = vadd.f32 %v251, %v187
    %v316 = vadd.f32 %v252, %v188
    %v317 = vadd.f32 %v253, %v189
    %v318 = vadd.f32 %v254, %v190
    %v319 = vadd.f32 %v255, %v191
    %v320 = vadd.f32 %v256, %v192
    %v321 = vadd.f32 %v257, %v193
    %v322 = vadd.f32 %v258, %v194
    %v323 = vadd.f32 %v259, %v195
    %v324 = vadd.f32 %v260, %v196
    %v325 = vadd.f32 %v261, %v197
    %v326 = vadd.f32 %v262, %v198
    %v327 = vadd.f32 %v263, %v199
    %v328 = vadd.f32 %v264, %v200
    %v329 = vadd.f32 %v265, %v201
    %v330 = vadd.f32 %v266, %v202
    %v331 = vadd.f32 %v267, %v203
    %v332 = vadd.f32 %v268, %v204
    %v333 = vadd.f32 %v269, %v205
    %v334 = vadd.f32 %v270, %v206
    %v335 = vadd.f32 %v271, %v207
    %v336 = vadd.f32 %v272, %v208
    %v337 = vadd.f32 %v273, %v209
    %v338 = vadd.f32 %v274, %v210
    %v339 = vadd.f32 %v275, %v211
    %v340 = vadd.f32 %v276, %v212
    %v341 = vadd.f32 %v277, %v213
    %v342 = vadd.f32 %v278, %v214
    %v343 = vadd.f32 %v279, %v215
    %v344 = vadd.f32 %v280, %v216
    %v345 = vadd.f32 %v281, %v217
    %v346 = vadd.f32 %v282, %v218
    %v347 = vadd.f32 %v283, %v219
    %v348 = vadd.f32 %v284, %v220
    %v349 = vadd.f32 %v285, %v221
    %v350 = vadd.f32 %v286, %v222
    %v351 = vadd.f32 %v287, %v223
    %v352 = vadd.f32 %v288, %v224
    %v353 = vadd.f32 %v289, %v225
    %v354 = vadd.f32 %v290, %v226
    %v355 = vadd.f32 %v291, %v227
    %v356 = vadd.f32 %v292, %v228
    %v357 = vadd.f32 %v293, %v229
    %v358 = vadd.f32 %v294, %v230
    %v359 = vadd.f32 %v295, %v231
    %v360 = vadd.f32 %v296, %v232
    %v361 = vadd.f32 %v297, %v233
    %v362 = vadd.f32 %v298, %v234
    %v363 = vadd.f32 %v299, %v235
    %v364 = vadd.f32 %v300, %v236
    %v365 = vadd.f32 %v301, %v237
    %v366 = vadd.f32 %v302, %v238
    %v367 = vadd.f32 %v303, %v239
    %v368 = vadd.f32 %v304, %v240
    %vm369 = vcmask 31744
    %370 = vst.msk [vmem:[#allocation2] sm:$0xff] %vm369, %v305
    %371 = vst.msk [vmem:[#allocation2 + $0x8] sm:$0xff] %vm369, %v306
    %372 = vst.msk [vmem:[#allocation2 + $0x10] sm:$0xff] %vm369, %v307
    %373 = vst.msk [vmem:[#allocation2 + $0x18] sm:$0xff] %vm369, %v308
    %374 = vst.msk [vmem:[#allocation2 + $0x20] sm:$0xff] %vm369, %v309
    %375 = vst.msk [vmem:[#allocation2 + $0x28] sm:$0xff] %vm369, %v310
    %376 = vst.msk [vmem:[#allocation2 + $0x30] sm:$0xff] %vm369, %v311
    %377 = vst.msk [vmem:[#allocation2 + $0x38] sm:$0xff] %vm369, %v312
    %378 = vst.msk [vmem:[#allocation2 + $0x40] sm:$0xff] %vm369, %v313
    %379 = vst.msk [vmem:[#allocation2 + $0x48] sm:$0xff] %vm369, %v314
    %380 = vst.msk [vmem:[#allocation2 + $0x50] sm:$0xff] %vm369, %v315
    %381 = vst.msk [vmem:[#allocation2 + $0x58] sm:$0xff] %vm369, %v316
    %382 = vst.msk [vmem:[#allocation2 + $0x60] sm:$0xff] %vm369, %v317
    %383 = vst.msk [vmem:[#allocation2 + $0x68] sm:$0xff] %vm369, %v318
    %384 = vst.msk [vmem:[#allocation2 + $0x70] sm:$0xff] %vm369, %v319
    %385 = vst.msk [vmem:[#allocation2 + $0x78] sm:$0xff] %vm369, %v320
    %386 = vst.msk [vmem:[#allocation2 + $0x80] sm:$0xff] %vm369, %v321
    %387 = vst.msk [vmem:[#allocation2 + $0x88] sm:$0xff] %vm369, %v322
    %388 = vst.msk [vmem:[#allocation2 + $0x90] sm:$0xff] %vm369, %v323
    %389 = vst.msk [vmem:[#allocation2 + $0x98] sm:$0xff] %vm369, %v324
    %390 = vst.msk [vmem:[#allocation2 + $0xa0] sm:$0xff] %vm369, %v325
    %391 = vst.msk [vmem:[#allocation2 + $0xa8] sm:$0xff] %vm369, %v326
    %392 = vst.msk [vmem:[#allocation2 + $0xb0] sm:$0xff] %vm369, %v327
    %393 = vst.msk [vmem:[#allocation2 + $0xb8] sm:$0xff] %vm369, %v328
    %394 = vst.msk [vmem:[#allocation2 + $0xc0] sm:$0xff] %vm369, %v329
    %395 = vst.msk [vmem:[#allocation2 + $0xc8] sm:$0xff] %vm369, %v330
    %396 = vst.msk [vmem:[#allocation2 + $0xd0] sm:$0xff] %vm369, %v331
    %397 = vst.msk [vmem:[#allocation2 + $0xd8] sm:$0xff] %vm369, %v332
    %398 = vst.msk [vmem:[#allocation2 + $0xe0] sm:$0xff] %vm369, %v333
    %399 = vst.msk [vmem:[#allocation2 + $0xe8] sm:$0xff] %vm369, %v334
    %400 = vst.msk [vmem:[#allocation2 + $0xf0] sm:$0xff] %vm369, %v335
    %401 = vst.msk [vmem:[#allocation2 + $0xf8] sm:$0xff] %vm369, %v336
    %402 = vst.msk [vmem:[#allocation2 + $0x100] sm:$0xff] %vm369, %v337
    %403 = vst.msk [vmem:[#allocation2 + $0x108] sm:$0xff] %vm369, %v338
    %404 = vst.msk [vmem:[#allocation2 + $0x110] sm:$0xff] %vm369, %v339
    %405 = vst.msk [vmem:[#allocation2 + $0x118] sm:$0xff] %vm369, %v340
    %406 = vst.msk [vmem:[#allocation2 + $0x120] sm:$0xff] %vm369, %v341
    %407 = vst.msk [vmem:[#allocation2 + $0x128] sm:$0xff] %vm369, %v342
    %408 = vst.msk [vmem:[#allocation2 + $0x130] sm:$0xff] %vm369, %v343
    %409 = vst.msk [vmem:[#allocation2 + $0x138] sm:$0xff] %vm369, %v344
    %410 = vst.msk [vmem:[#allocation2 + $0x140] sm:$0xff] %vm369, %v345
    %411 = vst.msk [vmem:[#allocation2 + $0x148] sm:$0xff] %vm369, %v346
    %412 = vst.msk [vmem:[#allocation2 + $0x150] sm:$0xff] %vm369, %v347
    %413 = vst.msk [vmem:[#allocation2 + $0x158] sm:$0xff] %vm369, %v348
    %414 = vst.msk [vmem:[#allocation2 + $0x160] sm:$0xff] %vm369, %v349
    %415 = vst.msk [vmem:[#allocation2 + $0x168] sm:$0xff] %vm369, %v350
    %416 = vst.msk [vmem:[#allocation2 + $0x170] sm:$0xff] %vm369, %v351
    %417 = vst.msk [vmem:[#allocation2 + $0x178] sm:$0xff] %vm369, %v352
    %418 = vst.msk [vmem:[#allocation2 + $0x180] sm:$0xff] %vm369, %v353
    %419 = vst.msk [vmem:[#allocation2 + $0x188] sm:$0xff] %vm369, %v354
    %420 = vst.msk [vmem:[#allocation2 + $0x190] sm:$0xff] %vm369, %v355
    %421 = vst.msk [vmem:[#allocation2 + $0x198] sm:$0xff] %vm369, %v356
    %422 = vst.msk [vmem:[#allocation2 + $0x1a0] sm:$0xff] %vm369, %v357
    %423 = vst.msk [vmem:[#allocation2 + $0x1a8] sm:$0xff] %vm369, %v358
    %424 = vst.msk [vmem:[#allocation2 + $0x1b0] sm:$0xff] %vm369, %v359
    %425 = vst.msk [vmem:[#allocation2 + $0x1b8] sm:$0xff] %vm369, %v360
    %426 = vst.msk [vmem:[#allocation2 + $0x1c0] sm:$0xff] %vm369, %v361
    %427 = vst.msk [vmem:[#allocation2 + $0x1c8] sm:$0xff] %vm369, %v362
    %428 = vst.msk [vmem:[#allocation2 + $0x1d0] sm:$0xff] %vm369, %v363
    %429 = vst.msk [vmem:[#allocation2 + $0x1d8] sm:$0xff] %vm369, %v364
    %430 = vst.msk [vmem:[#allocation2 + $0x1e0] sm:$0xff] %vm369, %v365
    %431 = vst.msk [vmem:[#allocation2 + $0x1e8] sm:$0xff] %vm369, %v366
    %432 = vst.msk [vmem:[#allocation2 + $0x1f0] sm:$0xff] %vm369, %v367
    %433 = vst.msk [vmem:[#allocation2 + $0x1f8] sm:$0xff] %vm369, %v368
    // Predicated region
    $region14: #{tpu_custom_call.1} parent=1 // pred_check
      %p434 = pneg %p12
    $region15: #{tpu_custom_call.1} parent=1 // pred_check_branch
      %436 = sbr.rel (%p434) target = $region17
    $region16: #{tpu_custom_call.1} parent=1 // pred_region
      %v437 = vld [vmem:[#allocation2] sm:$0xff]
      %v438 = vld [vmem:[#allocation2 + $0x8] sm:$0xff]
      %v439 = vld [vmem:[#allocation2 + $0x10] sm:$0xff]
      %v440 = vld [vmem:[#allocation2 + $0x18] sm:$0xff]
      %v441 = vld [vmem:[#allocation2 + $0x20] sm:$0xff]
      %v442 = vld [vmem:[#allocation2 + $0x28] sm:$0xff]
      %v443 = vld [vmem:[#allocation2 + $0x30] sm:$0xff]
      %v444 = vld [vmem:[#allocation2 + $0x38] sm:$0xff]
      %v445 = vld [vmem:[#allocation2 + $0x40] sm:$0xff]
      %v446 = vld [vmem:[#allocation2 + $0x48] sm:$0xff]
      %v447 = vld [vmem:[#allocation2 + $0x50] sm:$0xff]
      %v448 = vld [vmem:[#allocation2 + $0x58] sm:$0xff]
      %v449 = vld [vmem:[#allocation2 + $0x60] sm:$0xff]
      %v450 = vld [vmem:[#allocation2 + $0x68] sm:$0xff]
      %v451 = vld [vmem:[#allocation2 + $0x70] sm:$0xff]
      %v452 = vld [vmem:[#allocation2 + $0x78] sm:$0xff]
      %v453 = vld [vmem:[#allocation2 + $0x80] sm:$0xff]
      %v454 = vld [vmem:[#allocation2 + $0x88] sm:$0xff]
      %v455 = vld [vmem:[#allocation2 + $0x90] sm:$0xff]
      %v456 = vld [vmem:[#allocation2 + $0x98] sm:$0xff]
      %v457 = vld [vmem:[#allocation2 + $0xa0] sm:$0xff]
      %v458 = vld [vmem:[#allocation2 + $0xa8] sm:$0xff]
      %v459 = vld [vmem:[#allocation2 + $0xb0] sm:$0xff]
      %v460 = vld [vmem:[#allocation2 + $0xb8] sm:$0xff]
      %v461 = vld [vmem:[#allocation2 + $0xc0] sm:$0xff]
      %v462 = vld [vmem:[#allocation2 + $0xc8] sm:$0xff]
      %v463 = vld [vmem:[#allocation2 + $0xd0] sm:$0xff]
      %v464 = vld [vmem:[#allocation2 + $0xd8] sm:$0xff]
      %v465 = vld [vmem:[#allocation2 + $0xe0] sm:$0xff]
      %v466 = vld [vmem:[#allocation2 + $0xe8] sm:$0xff]
      %v467 = vld [vmem:[#allocation2 + $0xf0] sm:$0xff]
      %v468 = vld [vmem:[#allocation2 + $0xf8] sm:$0xff]
      %v469 = vld [vmem:[#allocation2 + $0x100] sm:$0xff]
      %v470 = vld [vmem:[#allocation2 + $0x108] sm:$0xff]
      %v471 = vld [vmem:[#allocation2 + $0x110] sm:$0xff]
      %v472 = vld [vmem:[#allocation2 + $0x118] sm:$0xff]
      %v473 = vld [vmem:[#allocation2 + $0x120] sm:$0xff]
      %v474 = vld [vmem:[#allocation2 + $0x128] sm:$0xff]
      %v475 = vld [vmem:[#allocation2 + $0x130] sm:$0xff]
      %v476 = vld [vmem:[#allocation2 + $0x138] sm:$0xff]
      %v477 = vld [vmem:[#allocation2 + $0x140] sm:$0xff]
      %v478 = vld [vmem:[#allocation2 + $0x148] sm:$0xff]
      %v479 = vld [vmem:[#allocation2 + $0x150] sm:$0xff]
      %v480 = vld [vmem:[#allocation2 + $0x158] sm:$0xff]
      %v481 = vld [vmem:[#allocation2 + $0x160] sm:$0xff]
      %v482 = vld [vmem:[#allocation2 + $0x168] sm:$0xff]
      %v483 = vld [vmem:[#allocation2 + $0x170] sm:$0xff]
      %v484 = vld [vmem:[#allocation2 + $0x178] sm:$0xff]
      %v485 = vld [vmem:[#allocation2 + $0x180] sm:$0xff]
      %v486 = vld [vmem:[#allocation2 + $0x188] sm:$0xff]
      %v487 = vld [vmem:[#allocation2 + $0x190] sm:$0xff]
      %v488 = vld [vmem:[#allocation2 + $0x198] sm:$0xff]
      %v489 = vld [vmem:[#allocation2 + $0x1a0] sm:$0xff]
      %v490 = vld [vmem:[#allocation2 + $0x1a8] sm:$0xff]
      %v491 = vld [vmem:[#allocation2 + $0x1b0] sm:$0xff]
      %v492 = vld [vmem:[#allocation2 + $0x1b8] sm:$0xff]
      %v493 = vld [vmem:[#allocation2 + $0x1c0] sm:$0xff]
      %v494 = vld [vmem:[#allocation2 + $0x1c8] sm:$0xff]
      %v495 = vld [vmem:[#allocation2 + $0x1d0] sm:$0xff]
      %v496 = vld [vmem:[#allocation2 + $0x1d8] sm:$0xff]
      %v497 = vld [vmem:[#allocation2 + $0x1e0] sm:$0xff]
      %v498 = vld [vmem:[#allocation2 + $0x1e8] sm:$0xff]
      %v499 = vld [vmem:[#allocation2 + $0x1f0] sm:$0xff]
      %v500 = vld [vmem:[#allocation2 + $0x1f8] sm:$0xff]
      %v501 = vsel %vm369, %v437, 0.0
      %v502 = vsel %vm369, %v438, 0.0
      %v503 = vadd.f32 %v501, %v502
      %v504 = vsel %vm369, %v439, 0.0
      %v505 = vadd.f32 %v503, %v504
      %v506 = vsel %vm369, %v440, 0.0
      %v507 = vadd.f32 %v505, %v506
      %v508 = vsel %vm369, %v441, 0.0
      %v509 = vadd.f32 %v507, %v508
      %v510 = vsel %vm369, %v442, 0.0
      %v511 = vadd.f32 %v509, %v510
      %v512 = vsel %vm369, %v443, 0.0
      %v513 = vadd.f32 %v511, %v512
      %v514 = vsel %vm369, %v444, 0.0
      %v515 = vadd.f32 %v513, %v514
      %v516 = vsel %vm369, %v445, 0.0
      %v517 = vadd.f32 %v515, %v516
      %v518 = vsel %vm369, %v446, 0.0
      %v519 = vadd.f32 %v517, %v518
      %v520 = vsel %vm369, %v447, 0.0
      %v521 = vadd.f32 %v519, %v520
      %v522 = vsel %vm369, %v448, 0.0
      %v523 = vadd.f32 %v521, %v522
      %v524 = vsel %vm369, %v449, 0.0
      %v525 = vadd.f32 %v523, %v524
      %v526 = vsel %vm369, %v450, 0.0
      %v527 = vadd.f32 %v525, %v526
      %v528 = vsel %vm369, %v451, 0.0
      %v529 = vadd.f32 %v527, %v528
      %v530 = vsel %vm369, %v452, 0.0
      %v531 = vadd.f32 %v529, %v530
      %v532 = vsel %vm369, %v453, 0.0
      %v533 = vadd.f32 %v531, %v532
      %v534 = vsel %vm369, %v454, 0.0
      %v535 = vadd.f32 %v533, %v534
      %v536 = vsel %vm369, %v455, 0.0
      %v537 = vadd.f32 %v535, %v536
      %v538 = vsel %vm369, %v456, 0.0
      %v539 = vadd.f32 %v537, %v538
      %v540 = vsel %vm369, %v457, 0.0
      %v541 = vadd.f32 %v539, %v540
      %v542 = vsel %vm369, %v458, 0.0
      %v543 = vadd.f32 %v541, %v542
      %v544 = vsel %vm369, %v459, 0.0
      %v545 = vadd.f32 %v543, %v544
      %v546 = vsel %vm369, %v460, 0.0
      %v547 = vadd.f32 %v545, %v546
      %v548 = vsel %vm369, %v461, 0.0
      %v549 = vadd.f32 %v547, %v548
      %v550 = vsel %vm369, %v462, 0.0
      %v551 = vadd.f32 %v549, %v550
      %v552 = vsel %vm369, %v463, 0.0
      %v553 = vadd.f32 %v551, %v552
      %v554 = vsel %vm369, %v464, 0.0
      %v555 = vadd.f32 %v553, %v554
      %v556 = vsel %vm369, %v465, 0.0
      %v557 = vadd.f32 %v555, %v556
      %v558 = vsel %vm369, %v466, 0.0
      %v559 = vadd.f32 %v557, %v558
      %v560 = vsel %vm369, %v467, 0.0
      %v561 = vadd.f32 %v559, %v560
      %v562 = vsel %vm369, %v468, 0.0
      %v563 = vadd.f32 %v561, %v562
      %v564 = vrot.slane %v563, 4
      %v565 = vadd.f32 %v563, %v564
      %v566 = vrot.slane %v565, 2
      %v567 = vadd.f32 %v565, %v566
      %v568 = vrot.slane %v567, 1
      %v569 = vadd.f32 %v567, %v568
      %v570 = vsel %vm369, %v469, 0.0
      %v571 = vsel %vm369, %v470, 0.0
      %v572 = vadd.f32 %v570, %v571
      %v573 = vsel %vm369, %v471, 0.0
      %v574 = vadd.f32 %v572, %v573
      %v575 = vsel %vm369, %v472, 0.0
      %v576 = vadd.f32 %v574, %v575
      %v577 = vsel %vm369, %v473, 0.0
      %v578 = vadd.f32 %v576, %v577
      %v579 = vsel %vm369, %v474, 0.0
      %v580 = vadd.f32 %v578, %v579
      %v581 = vsel %vm369, %v475, 0.0
      %v582 = vadd.f32 %v580, %v581
      %v583 = vsel %vm369, %v476, 0.0
      %v584 = vadd.f32 %v582, %v583
      %v585 = vsel %vm369, %v477, 0.0
      %v586 = vadd.f32 %v584, %v585
      %v587 = vsel %vm369, %v478, 0.0
      %v588 = vadd.f32 %v586, %v587
      %v589 = vsel %vm369, %v479, 0.0
      %v590 = vadd.f32 %v588, %v589
      %v591 = vsel %vm369, %v480, 0.0
      %v592 = vadd.f32 %v590, %v591
      %v593 = vsel %vm369, %v481, 0.0
      %v594 = vadd.f32 %v592, %v593
      %v595 = vsel %vm369, %v482, 0.0
      %v596 = vadd.f32 %v594, %v595
      %v597 = vsel %vm369, %v483, 0.0
      %v598 = vadd.f32 %v596, %v597
      %v599 = vsel %vm369, %v484, 0.0
      %v600 = vadd.f32 %v598, %v599
      %v601 = vsel %vm369, %v485, 0.0
      %v602 = vadd.f32 %v600, %v601
      %v603 = vsel %vm369, %v486, 0.0
      %v604 = vadd.f32 %v602, %v603
      %v605 = vsel %vm369, %v487, 0.0
      %v606 = vadd.f32 %v604, %v605
      %v607 = vsel %vm369, %v488, 0.0
      %v608 = vadd.f32 %v606, %v607
      %v609 = vsel %vm369, %v489, 0.0
      %v610 = vadd.f32 %v608, %v609
      %v611 = vsel %vm369, %v490, 0.0
      %v612 = vadd.f32 %v610, %v611
      %v613 = vsel %vm369, %v491, 0.0
      %v614 = vadd.f32 %v612, %v613
      %v615 = vsel %vm369, %v492, 0.0
      %v616 = vadd.f32 %v614, %v615
      %v617 = vsel %vm369, %v493, 0.0
      %v618 = vadd.f32 %v616, %v617
      %v619 = vsel %vm369, %v494, 0.0
      %v620 = vadd.f32 %v618, %v619
      %v621 = vsel %vm369, %v495, 0.0
      %v622 = vadd.f32 %v620, %v621
      %v623 = vsel %vm369, %v496, 0.0
      %v624 = vadd.f32 %v622, %v623
      %v625 = vsel %vm369, %v497, 0.0
      %v626 = vadd.f32 %v624, %v625
      %v627 = vsel %vm369, %v498, 0.0
      %v628 = vadd.f32 %v626, %v627
      %v629 = vsel %vm369, %v499, 0.0
      %v630 = vadd.f32 %v628, %v629
      %v631 = vsel %vm369, %v500, 0.0
      %v632 = vadd.f32 %v630, %v631
      %v633 = vrot.slane %v632, 4
      %v634 = vadd.f32 %v632, %v633
      %v635 = vrot.slane %v634, 2
      %v636 = vadd.f32 %v634, %v635
      %v637 = vrot.slane %v636, 1
      %v638 = vadd.f32 %v636, %v637
      %vm641 = vcmask 1041409
      %v642 = vsel %vm641, %v638, %v569
      %vm644 = vcmask 25600
      %645 = vst.msk [vmem:[#allocation3] sm:$0x3] %vm644, %v642
    $region17: #{tpu_custom_call.1} parent=1 // pred_fallthru
      _
    // Predicated region
    $region18: #{tpu_custom_call.1} parent=1 // pred_check
      _
    $region19: #{tpu_custom_call.1} parent=1 // pred_check_branch
      %647 = sbr.rel (0) target = $region21
    $region20: #{tpu_custom_call.1} parent=1 // pred_region
      %s649 = ssub.s32 32, 32
      %650 = vsyncadd [#allocation4], %s649
      %s652 = sshll.u32 [#allocation3], 4
      %s653 = int_to_ptr.vmem [resolvable:$true] %s652
      %655 = dma.vmem_to_hbm [thread:$0]  %s653, 32, %s2, [#allocation4]
    $region21: #{tpu_custom_call.1} parent=1 // pred_fallthru
      _
    // Predicated region
    $region22: #{tpu_custom_call.1} parent=1 // pred_check
      _
    $region23: #{tpu_custom_call.1} parent=1 // pred_check_branch
      %657 = sbr.rel (0) target = $region25
    $region24: #{tpu_custom_call.1} parent=1 // pred_region
      %658 = dma.done [#allocation4], 32
    $region25: #{tpu_custom_call.1} parent=1 // pred_fallthru
      _
    %659 = vsyncpa [#allocation4], 1

</llo_original>
